<compile_context>
chip_gen: v7x
topology: tpu7x:2x2x1
jax: 0.10.0
libtpu: 0.0.40
codegen_flags: <defaults>
</compile_context>

<pallas_src>
import functools

import jax
import jax.numpy as jnp
from jax.experimental import pallas as pl
from jax.experimental.pallas import tpu as pltpu


def _cdiv(a, b):
    return -(-a // b)


def _round_up(x, m):
    return _cdiv(x, m) * m


def _vmem_capacity_bytes():
    """Physical VMEM per core; conservative (v7x-sized) fallback."""
    try:
        cap = getattr(pltpu.get_tpu_info(), "vmem_capacity_bytes", None)
        if cap:
            return int(cap)
    except Exception:
        pass
    return 64 * 1024 * 1024


def _focal_loss_kernel(x_ref, tgt_ref, alpha_ref, out_ref, acc_ref, *,
                       n_valid, tiles_per_partial, gamma, use_alpha,
                       has_padding):
    """One (C, TN) column tile of the lane-dense focal loss.

    x_ref:     (C, TN)  logits (classes on sublanes, batch on lanes)
    tgt_ref:   (1, TN)  int32 target ids
    alpha_ref: (C, 1)   f32 per-class alpha (unused when use_alpha=False)
    out_ref:   (1,1,1)  f32 per-partial sum (one block per TensorCore)
    acc_ref:   (1, TN)  f32 running per-lane partial sums (VMEM scratch)
    """
    p = pl.program_id(0)
    i = pl.program_id(1)

    @pl.when(i == 0)
    def _init():
        acc_ref[...] = jnp.zeros_like(acc_ref)

    x = x_ref[...].astype(jnp.float32)        # (C, TN)
    tgt = tgt_ref[...]                        # (1, TN) int32
    c, tn = x.shape

    # Numerically stable log-softmax over the class (sublane) axis.
    m = jnp.max(x, axis=0, keepdims=True)                        # (1, TN)
    xc = x - m                                                   # (C, TN)
    lse = jnp.log(jnp.sum(jnp.exp(xc), axis=0, keepdims=True))   # (1, TN)

    # One-hot class mask via iota compare (replaces torch scatter_).
    class_ids = jax.lax.broadcasted_iota(jnp.int32, (c, tn), 0)
    onehot = (class_ids == tgt).astype(jnp.float32)              # (C, TN)

    # log p[target] / p[target] via LSE (no full softmax divide, no log(0)).
    log_p = jnp.sum(xc * onehot, axis=0, keepdims=True) - lse    # (1, TN)
    probs = jnp.exp(log_p)                                       # (1, TN)

    one_minus_p = 1.0 - probs
    if float(gamma) == 2.0:
        focal = one_minus_p * one_minus_p       # explicit square, no pow()
    else:
        focal = jnp.power(one_minus_p, jnp.float32(gamma))
    loss_vec = -focal * log_p                                    # (1, TN)

    if use_alpha:
        alpha = alpha_ref[...].astype(jnp.float32)               # (C, 1)
        alpha_g = jnp.sum(alpha * onehot, axis=0, keepdims=True)
        loss_vec = alpha_g * loss_vec

    # Accumulate into the wide f32 scratch; mask only in tiles that actually
    # touch padded batch columns (last data tile + any fully padded tiles).
    if has_padding:
        col0 = (p * tiles_per_partial + i) * tn
        touches_pad = col0 + tn > n_valid

        @pl.when(touches_pad)
        def _masked():
            col = col0 + jax.lax.broadcasted_iota(jnp.int32, (1, tn), 1)
            acc_ref[...] += jnp.where(col < n_valid, loss_vec, 0.0)

        @pl.when(jnp.logical_not(touches_pad))
        def _unmasked():
            acc_ref[...] += loss_vec
    else:
        acc_ref[...] += loss_vec

    # Single cross-lane reduction per partial, only at the end.
    @pl.when(i == pl.num_programs(1) - 1)
    def _finalize():
        out_ref[...] = jnp.sum(acc_ref[...], axis=1, keepdims=True)[None]


def focal_loss(inputs, targets, alpha=None, *, gamma=2.0, size_average=True,
               logits_dtype=jnp.bfloat16):
    """inputs: (N, C) float, targets: (N,) int in [0, C), alpha: (C,) or None."""
    n, c = inputs.shape
    use_alpha = alpha is not None
    if alpha is None:
        alpha = jnp.ones((c,), dtype=jnp.float32)

    x_itemsize = jnp.dtype(logits_dtype).itemsize
    sub_mult = 8 * (4 // x_itemsize)          # sublane tile: 8 for f32, 16 for bf16
    c_pad = _round_up(c, sub_mult)

    # ---- per-generation VMEM sizing -------------------------------------
    vmem_cap = _vmem_capacity_bytes()
    vmem_limit = min(vmem_cap * 3 // 4, 96 * 1024 * 1024)   # 48 MiB v7x, 96 MiB v5e/v6e
    tile_budget = vmem_limit // 2                           # streamed working set

    # VMEM bytes per batch column: Pallas double-buffers every input, and
    # blocks with <8 sublanes pad up to the sublane tile in VMEM.
    vmem_per_col = (2 * c_pad * x_itemsize    # logits tile, double-buffered
                    + 2 * 8 * 4               # (1,tn) i32 targets -> 8 sublanes, x2
                    + 8 * 4)                  # (1,tn) f32 accumulator scratch
    max_tn_vmem = max(128, (tile_budget // vmem_per_col) // 128 * 128)

    # Target ~4 MiB of *real* streamed bytes per grid step so the ~0.35us
    # per-step overhead and DMA grain stay small relative to step time.
    real_bytes_per_col = c * x_itemsize + 4
    target_tn = max(128, ((4 * 1024 * 1024) // real_bytes_per_col) // 128 * 128)

    tn = min(target_tn, max_tn_vmem, _round_up(n, 128))
    if n > 256:
        # keep >= 2 column tiles so both v7x TensorCores get work
        tn = min(tn, _round_up(_cdiv(n, 2), 128))
    tn = max(tn, 128)

    n_tiles = _cdiv(n, tn)
    n_partials = 2 if n_tiles >= 2 else 1     # one partial sum per v7x TensorCore
    tiles_per_partial = _cdiv(n_tiles, n_partials)
    total_tiles = n_partials * tiles_per_partial
    n_pad = total_tiles * tn
    has_padding = n_pad != n

    # Lane-dense relayout: classes on sublanes, batch on the 128-lane axis.
    # bf16 halves both this single fused relayout pass and the kernel's HBM
    # read.  Padded columns are zeros (finite) and additionally masked in-kernel.
    x_t = jnp.pad(inputs.astype(logits_dtype).T, ((0, 0), (0, n_pad - n)))
    tgt = jnp.pad(targets.astype(jnp.int32).reshape(1, -1),
                  ((0, 0), (0, n_pad - n)))
    alpha2d = jnp.asarray(alpha, dtype=jnp.float32).reshape(c, 1)

    kernel = functools.partial(
        _focal_loss_kernel, n_valid=n, tiles_per_partial=tiles_per_partial,
        gamma=gamma, use_alpha=use_alpha, has_padding=has_padding)

    partial_sums = pl.pallas_call(
        kernel,
        out_shape=jax.ShapeDtypeStruct((n_partials, 1, 1), jnp.float32),
        grid_spec=pltpu.PrefetchScalarGridSpec(
            num_scalar_prefetch=0,
            grid=(n_partials, tiles_per_partial),
            in_specs=[
                pl.BlockSpec((c, tn),
                             lambda p, i: (0, p * tiles_per_partial + i)),
                pl.BlockSpec((1, tn),
                             lambda p, i: (0, p * tiles_per_partial + i)),
                pl.BlockSpec((c, 1), lambda p, i: (0, 0)),   # alpha (resident)
            ],
            out_specs=pl.BlockSpec((1, 1, 1), lambda p, i: (p, 0, 0)),
            scratch_shapes=[pltpu.VMEM((1, tn), jnp.float32)],
        ),
        compiler_params=pltpu.CompilerParams(
            dimension_semantics=("parallel", "arbitrary"),
            vmem_limit_bytes=int(vmem_limit),
        ),
    )(x_t, tgt, alpha2d)

    total = jnp.sum(partial_sums)
    return total / jnp.float32(n) if size_average else total


if __name__ == "__main__":
    key = jax.random.PRNGKey(0)
    N, C = 8, 4   # small batch of logits over 4 classes

    k1, k2 = jax.random.split(key)
    inputs = jax.random.normal(k1, (N, C), dtype=jnp.float32)
    targets = jax.random.randint(k2, (N,), 0, C, dtype=jnp.int32)

    # --- alpha=None fast path (PyTorch default: alpha = ones) -------------
    loss = focal_loss(inputs, targets)
    jax.block_until_ready(loss)

    # pure-JAX reference on the same bf16-rounded logits the kernel streams
    x_rounded = inputs.astype(jnp.bfloat16).astype(jnp.float32)
    logp_all = jax.nn.log_softmax(x_rounded, axis=1)
    logp = jnp.take_along_axis(logp_all, targets[:, None], axis=1)
    p = jnp.exp(logp)
    ref = jnp.mean(-(1.0 - p) ** 2 * logp)
    assert jnp.allclose(loss, ref, atol=1e-5, rtol=1e-5), (loss, ref)

    # --- explicit per-class alpha path -------------------------------------
    alpha = jnp.array([0.25, 0.5, 1.0, 2.0], dtype=jnp.float32)
    loss_a = focal_loss(inputs, targets, alpha)
    jax.block_until_ready(loss_a)
    ref_a = jnp.mean(-alpha[targets][:, None] * (1.0 - p) ** 2 * logp)
    assert jnp.allclose(loss_a, ref_a, atol=1e-5, rtol=1e-5), (loss_a, ref_a)

    print("KERNEL_OK")
</pallas_src>

<mosaic_0001>
module attributes {stable_mosaic.version = 11 : i64} {
  func.func @_focal_loss_kernel(%arg0: i32, %arg1: i32, %arg2: memref<4x128xbf16, #tpu.memory_space<vmem>>, %arg3: memref<1x128xi32, #tpu.memory_space<vmem>>, %arg4: memref<4x1xf32, #tpu.memory_space<vmem>>, %arg5: memref<1x1x1xf32, #tpu.memory_space<vmem>>, %arg6: memref<1x128xf32, #tpu.memory_space<vmem>>) attributes {dimension_semantics = [#tpu.dimension_semantics<parallel>, #tpu.dimension_semantics<arbitrary>], iteration_bounds = array<i64: 1, 1>, scalar_prefetch = 0 : i64, scratch_operands = 1 : i64, tpu.core_type = #tpu.core_type<tc>, window_params = [{transform_indices = @transform_0, window_bounds = array<i64: 4, 128>}, {transform_indices = @transform_1, window_bounds = array<i64: 1, 128>}, {pipeline_mode = #tpu.pipeline_mode<synchronous>, transform_indices = @transform_2, window_bounds = array<i64: 4, 1>}, {transform_indices = @transform_3, window_bounds = array<i64: 1, 1, 1>}]} {
    %c0_i32 = arith.constant 0 : i32
    %0 = arith.cmpi eq, %arg1, %c0_i32 : i32
    %1 = arith.extui %0 : i1 to i32
    %c0_i32_0 = arith.constant 0 : i32
    %2 = arith.cmpi ne, %1, %c0_i32_0 : i32
    scf.if %2 {
      %cst_13 = arith.constant 0.000000e+00 : f32
      %43 = vector.broadcast %cst_13 : f32 to vector<1x128xf32>
      %c0_14 = arith.constant 0 : index
      %c0_15 = arith.constant 0 : index
      %44 = vector.load %arg6[%c0_14, %c0_15] : memref<1x128xf32, #tpu.memory_space<vmem>>, vector<1x128xf32>
      tpu.vector_store %arg6[%c0_14, %c0_15], %43 {strides = array<i32>} : memref<1x128xf32, #tpu.memory_space<vmem>>, vector<1x128xf32>,
    } else {
    }
    %c0 = arith.constant 0 : index
    %c0_1 = arith.constant 0 : index
    %3 = vector.load %arg2[%c0, %c0_1] : memref<4x128xbf16, #tpu.memory_space<vmem>>, vector<4x128xbf16>
    %4 = arith.extf %3 : vector<4x128xbf16> to vector<4x128xf32>
    %c0_2 = arith.constant 0 : index
    %c0_3 = arith.constant 0 : index
    %5 = vector.load %arg3[%c0_2, %c0_3] : memref<1x128xi32, #tpu.memory_space<vmem>>, vector<1x128xi32>
    %cst = arith.constant dense<0xFF800000> : vector<128xf32>
    %6 = vector.multi_reduction <maximumf>, %4, %cst [0] : vector<4x128xf32> to vector<128xf32>
    %7 = vector.shape_cast %6 : vector<128xf32> to vector<1x128xf32>
    %8 = vector.broadcast %7 : vector<1x128xf32> to vector<4x128xf32>
    %9 = arith.subf %4, %8 : vector<4x128xf32>
    %10 = math.exp %9 : vector<4x128xf32>
    %cst_4 = arith.constant dense<0.000000e+00> : vector<128xf32>
    %11 = vector.multi_reduction <add>, %10, %cst_4 [0] : vector<4x128xf32> to vector<128xf32>
    %12 = vector.shape_cast %11 : vector<128xf32> to vector<1x128xf32>
    %13 = math.log %12 : vector<1x128xf32>
    %14 = tpu.iota {dimensions = array<i32: 0>} : vector<4x128xi32>
    %15 = vector.broadcast %5 : vector<1x128xi32> to vector<4x128xi32>
    %16 = arith.cmpi eq, %14, %15 : vector<4x128xi32>
    %17 = arith.extui %16 : vector<4x128xi1> to vector<4x128xi32>
    %18 = arith.sitofp %17 : vector<4x128xi32> to vector<4x128xf32>
    %19 = arith.mulf %9, %18 : vector<4x128xf32>
    %cst_5 = arith.constant dense<0.000000e+00> : vector<128xf32>
    %20 = vector.multi_reduction <add>, %19, %cst_5 [0] : vector<4x128xf32> to vector<128xf32>
    %21 = vector.shape_cast %20 : vector<128xf32> to vector<1x128xf32>
    %22 = arith.subf %21, %13 : vector<1x128xf32>
    %23 = math.exp %22 : vector<1x128xf32>
    %cst_6 = arith.constant 1.000000e+00 : f32
    %24 = vector.broadcast %cst_6 : f32 to vector<1x128xf32>
    %25 = arith.subf %24, %23 : vector<1x128xf32>
    %26 = arith.mulf %25, %25 : vector<1x128xf32>
    %cst_7 = arith.constant 0.000000e+00 : f32
    %27 = vector.broadcast %cst_7 : f32 to vector<1x128xf32>
    %28 = arith.subf %27, %26 : vector<1x128xf32>
    %29 = arith.mulf %28, %22 : vector<1x128xf32>
    %c1_i32 = arith.constant 1 : i32
    %30 = arith.muli %arg0, %c1_i32 : i32
    %31 = arith.addi %30, %arg1 : i32
    %c128_i32 = arith.constant 128 : i32
    %32 = arith.muli %31, %c128_i32 : i32
    %c128_i32_8 = arith.constant 128 : i32
    %33 = arith.addi %32, %c128_i32_8 : i32
    %c8_i32 = arith.constant 8 : i32
    %34 = arith.cmpi sgt, %33, %c8_i32 : i32
    %35 = arith.extui %34 : i1 to i32
    %c0_i32_9 = arith.constant 0 : i32
    %36 = arith.cmpi ne, %35, %c0_i32_9 : i32
    scf.if %36 {
      %43 = tpu.iota {dimensions = array<i32: 1>} : vector<1x128xi32>
      %44 = vector.broadcast %32 : i32 to vector<1x128xi32>
      %45 = arith.addi %44, %43 : vector<1x128xi32>
      %c0_13 = arith.constant 0 : index
      %c0_14 = arith.constant 0 : index
      %46 = vector.load %arg6[%c0_13, %c0_14] : memref<1x128xf32, #tpu.memory_space<vmem>>, vector<1x128xf32>
      %c8_i32_15 = arith.constant 8 : i32
      %47 = vector.broadcast %c8_i32_15 : i32 to vector<1x128xi32>
      %48 = arith.cmpi slt, %45, %47 : vector<1x128xi32>
      %cst_16 = arith.constant 0.000000e+00 : f32
      %49 = vector.broadcast %cst_16 : f32 to vector<1x128xf32>
      %50 = arith.select %48, %29, %49 : vector<1x128xi1>, vector<1x128xf32>
      %51 = arith.addf %46, %50 : vector<1x128xf32>
      %c0_17 = arith.constant 0 : index
      %c0_18 = arith.constant 0 : index
      %52 = vector.load %arg6[%c0_17, %c0_18] : memref<1x128xf32, #tpu.memory_space<vmem>>, vector<1x128xf32>
      tpu.vector_store %arg6[%c0_17, %c0_18], %51 {strides = array<i32>} : memref<1x128xf32, #tpu.memory_space<vmem>>, vector<1x128xf32>,
    } else {
    }
    %true = arith.constant true
    %37 = arith.xori %34, %true : i1
    %38 = arith.extui %37 : i1 to i32
    %c0_i32_10 = arith.constant 0 : i32
    %39 = arith.cmpi ne, %38, %c0_i32_10 : i32
    scf.if %39 {
      %c0_13 = arith.constant 0 : index
      %c0_14 = arith.constant 0 : index
      %43 = vector.load %arg6[%c0_13, %c0_14] : memref<1x128xf32, #tpu.memory_space<vmem>>, vector<1x128xf32>
      %44 = arith.addf %43, %29 : vector<1x128xf32>
      %c0_15 = arith.constant 0 : index
      %c0_16 = arith.constant 0 : index
      %45 = vector.load %arg6[%c0_15, %c0_16] : memref<1x128xf32, #tpu.memory_space<vmem>>, vector<1x128xf32>
      tpu.vector_store %arg6[%c0_15, %c0_16], %44 {strides = array<i32>} : memref<1x128xf32, #tpu.memory_space<vmem>>, vector<1x128xf32>,
    } else {
    }
    %c0_i32_11 = arith.constant 0 : i32
    %40 = arith.cmpi eq, %arg1, %c0_i32_11 : i32
    %41 = arith.extui %40 : i1 to i32
    %c0_i32_12 = arith.constant 0 : i32
    %42 = arith.cmpi ne, %41, %c0_i32_12 : i32
    scf.if %42 {
      %c0_13 = arith.constant 0 : index
      %c0_14 = arith.constant 0 : index
      %43 = vector.load %arg6[%c0_13, %c0_14] : memref<1x128xf32, #tpu.memory_space<vmem>>, vector<1x128xf32>
      %cst_15 = arith.constant dense<0.000000e+00> : vector<1xf32>
      %44 = vector.multi_reduction <add>, %43, %cst_15 [1] : vector<1x128xf32> to vector<1xf32>
      %45 = vector.shape_cast %44 : vector<1xf32> to vector<1x1xf32>
      %46 = vector.shape_cast %45 : vector<1x1xf32> to vector<1x1x1xf32>
      %c0_16 = arith.constant 0 : index
      %c0_17 = arith.constant 0 : index
      %c0_18 = arith.constant 0 : index
      %47 = vector.load %arg5[%c0_16, %c0_17, %c0_18] : memref<1x1x1xf32, #tpu.memory_space<vmem>>, vector<1x1x1xf32>
      tpu.vector_store %arg5[%c0_16, %c0_17, %c0_18], %46 {strides = array<i32>} : memref<1x1x1xf32, #tpu.memory_space<vmem>>, vector<1x1x1xf32>,
    } else {
    }
    return
  }
  func.func @transform_0(%arg0: i32, %arg1: i32) -> (i32, i32) {
    %c1_i32 = arith.constant 1 : i32
    %0 = arith.muli %arg0, %c1_i32 : i32
    %1 = arith.addi %0, %arg1 : i32
    %c0_i32 = arith.constant 0 : i32
    %c0_i32_0 = arith.constant 0 : i32
    return %c0_i32, %1 : i32, i32
  }
  func.func @transform_1(%arg0: i32, %arg1: i32) -> (i32, i32) {
    %c1_i32 = arith.constant 1 : i32
    %0 = arith.muli %arg0, %c1_i32 : i32
    %1 = arith.addi %0, %arg1 : i32
    %c0_i32 = arith.constant 0 : i32
    %c0_i32_0 = arith.constant 0 : i32
    return %c0_i32, %1 : i32, i32
  }
  func.func @transform_2(%arg0: i32, %arg1: i32) -> (i32, i32) {
    %c0_i32 = arith.constant 0 : i32
    %c0_i32_0 = arith.constant 0 : i32
    %c0_i32_1 = arith.constant 0 : i32
    return %c0_i32, %c0_i32_0 : i32, i32
  }
  func.func @transform_3(%arg0: i32, %arg1: i32) -> (i32, i32, i32) {
    %c0_i32 = arith.constant 0 : i32
    %c0_i32_0 = arith.constant 0 : i32
    %c0_i32_1 = arith.constant 0 : i32
    return %arg0, %c0_i32, %c0_i32_0 : i32, i32, i32
  }
}

</mosaic_0001>

<llo_original>
// kernel: tpu_custom_call.1
$region0: #{tpu_custom_call.1}
  #allocation0 [shape = 'u32[]', space=smem, size = 0x4, offset = 0x4, fixed_abs, tag = 'smem constant byte address 0x4 - core index']
  #allocation1 [shape = 'u32[144,128]{1,0:T(1,128)}', space=vmem, size = 0x12000, scoped, tag = 'internal scratch']
  #allocation2 [shape = 'f32[1,128]{1,0:T(1,128)}', space=vmem, size = 0x200, scoped, tag = 'scratch operand']
  %s0 = inlined_call_operand.vmem [shape: bf16[4,128], index: 0, kind: input, shape index: {}]
  %s1 = inlined_call_operand.vmem [shape: s32[1,128], index: 1, kind: input, shape index: {}]
  %s2 = inlined_call_operand.vmem [shape: f32[4,1], index: 2, kind: input, shape index: {}]
  %s3 = inlined_call_operand.hbm [shape: f32[1,1,1], index: 3, kind: output, shape index: {}]
  %s4 = sld [smem:[#allocation0]]
  $region38: #{tpu_custom_call.1} parent=0
    _
  %s6 = ssub.s32 1, %s4
  %s7 = scalar_select 0, %s6, %s4
  $region1: #{tpu_custom_call.1} parent=0
    #allocation3 [shape = 'u8[512]{0}', space=vmem, size = 0x400, scoped, tag = 'output window, operand 0, single buffered']
    #allocation4 [shape = 's32[1]{0}', space=sflag, size = 0x4, scoped, tag = 'scoped memory for tpu_custom_call.1']
    %8 = vsyncpa [#allocation4], 0
    // Predicated region
    $region2: #{tpu_custom_call.1} parent=1 // pred_check
      _
    $region3: #{tpu_custom_call.1} parent=1 // pred_check_branch
      %10 = sbr.rel (0) target = $region5
    $region4: #{tpu_custom_call.1} parent=1 // pred_region
      %s11 = sadd.s32 0, 0
      %p12 = scmp.lt.s32.totalorder %s11, 0
      %s13 = scalar_select %p12, %s11, 0
      %s14 = smul.addr %s13, 2
      %s15 = scalar_lea.vmem %s0, %s14
      %s16 = sadd.s32 0, 0
    $region5: #{tpu_custom_call.1} parent=1 // pred_fallthru
      _
    // Predicated region
    $region6: #{tpu_custom_call.1} parent=1 // pred_check
      _
    $region7: #{tpu_custom_call.1} parent=1 // pred_check_branch
      %18 = sbr.rel (0) target = $region9
    $region8: #{tpu_custom_call.1} parent=1 // pred_region
      %s19 = sadd.s32 0, 0
      %p20 = scmp.lt.s32.totalorder %s19, 0
      %s21 = scalar_select %p20, %s19, 0
      %s22 = scalar_lea.vmem %s1, %s21
      %s23 = sadd.s32 0, 0
    $region9: #{tpu_custom_call.1} parent=1 // pred_fallthru
      _
    // Predicated region
    $region10: #{tpu_custom_call.1} parent=1 // pred_check
      _
    $region11: #{tpu_custom_call.1} parent=1 // pred_check_branch
      %25 = sbr.rel (0) target = $region13
    $region12: #{tpu_custom_call.1} parent=1 // pred_region
      _
    $region13: #{tpu_custom_call.1} parent=1 // pred_fallthru
      _
    %s26 = sadd.s32 0, 0
    %p27 = scmp.lt.s32.totalorder %s26, 0
    %s28 = scalar_select %p27, %s26, 0
    %s29 = smul.addr %s28, 2
    %s30 = scalar_lea.vmem %s0, %s29
    %s31 = sadd.s32 0, 0
    %p32 = scmp.lt.s32.totalorder %s31, 0
    %s33 = scalar_select %p32, %s31, 0
    %s34 = scalar_lea.vmem %s1, %s33
    %s35 = sadd.s32 0, 0
    %p36 = scmp.lt.s32.totalorder %s35, 0
    %s37 = scalar_select %p36, %s35, 0
    %s38 = smul.addr %s37, 2
    %s39 = scalar_lea.vmem %s0, %s38
    %s40 = sadd.s32 0, 0
    %s41 = sadd.s32 0, 0
    %p42 = scmp.lt.s32.totalorder %s41, 0
    %s43 = scalar_select %p42, %s41, 0
    %s44 = scalar_lea.vmem %s1, %s43
    %s45 = sadd.s32 0, 0
    %p46 = scmp.eq.s32.totalorder 0, 0
    // Predicated region
    $region14: #{tpu_custom_call.1} parent=1 // pred_check
      %p47 = pneg %p46
    $region15: #{tpu_custom_call.1} parent=1 // pred_check_branch
      %49 = sbr.rel (%p47) target = $region17
    $region16: #{tpu_custom_call.1} parent=1 // pred_region
      %50 = vst [vmem:[#allocation2] sm:$0x1] 0.0
    $region17: #{tpu_custom_call.1} parent=1 // pred_fallthru
      _
    %v51 = vld [vmem:[%s39] sm:$0x3]
    %v52 = vunpack.c.l.bf16 %v51
    %v53 = vld [vmem:[%s44] sm:$0x1]
    %vm54 = vcmask 1043456
    %v55 = vsel %vm54, %v52, -inf
    %v56 = vrot.slane %v55, 4
    %v57 = vmax.f32 %v55, %v56
    %v58 = vrot.slane %v57, 2
    %v59 = vmax.f32 %v57, %v58
    %v60 = vrot.slane %v59, 1
    %v61 = vmax.f32 %v59, %v60
    %v62 = vsub.f32 %v52, %v61
    %v63 = vmul.f32 %v62, 1.442695
    %v64 = vpow.pop %v63
    %v65 = vsel %vm54, %v64, 0.0
    %v66 = vrot.slane %v65, 4
    %v67 = vadd.f32 %v65, %v66
    %v68 = vrot.slane %v67, 2
    %v69 = vadd.f32 %v67, %v68
    %v70 = vrot.slane %v69, 1
    %v71 = vadd.f32 %v69, %v70
    %v72 = vlog2.pop %v71
    %v73 = vmul.f32 %v72, 0.6931472
    %v74 = vlaneseq
    %v75 = vshrl.u32 %v74, 7
    %v76 = vlaneseq
    %v77 = vshrl.u32 %v76, 7
    %v78 = vsub.s32 0, %v77
    %v79 = vrot.slane %v53, %v78
    %vm80 = vcmp.eq.s32.totalorder %v75, %v79
    %v81 = vsel %vm80, 1, 0
    %v82 = vcvt.s32.f32 %v81
    %v83 = vmul.f32 %v62, %v82
    %v84 = vsel %vm54, %v83, 0.0
    %v85 = vrot.slane %v84, 4
    %v86 = vadd.f32 %v84, %v85
    %v87 = vrot.slane %v86, 2
    %v88 = vadd.f32 %v86, %v87
    %v89 = vrot.slane %v88, 1
    %v90 = vadd.f32 %v88, %v89
    %v91 = vsub.f32 %v90, %v73
    %v92 = vmul.f32 %v91, 1.442695
    %v93 = vpow.pop %v92
    %v94 = vsub.f32 1.0, %v93
    %v95 = vmul.f32 %v94, %v94
    %v96 = vsub.f32 0.0, %v95
    %v97 = vmul.f32 %v96, %v91
    %s98 = sadd.s32 0, 0
    %s99 = smul.u32 %s98, 128
    %s100 = sadd.s32 %s99, 128
    %p101 = scmp.gt.s32.totalorder %s100, 8
    // Predicated region
    $region18: #{tpu_custom_call.1} parent=1 // pred_check
      %p102 = pneg %p101
    $region19: #{tpu_custom_call.1} parent=1 // pred_check_branch
      %104 = sbr.rel (%p102) target = $region21
    $region20: #{tpu_custom_call.1} parent=1 // pred_region
      %v105 = vlaneseq
      %v106 = vand.u32 %v105, 127
      %v107 = vstv %s99
      %v108 = vadd.s32 %v107, %v106
      %v109 = vld [vmem:[#allocation2] sm:$0x1]
      %vm110 = vcmp.lt.s32.totalorder %v108, 8
      %v111 = vsel %vm110, %v97, 0.0
      %v112 = vadd.f32 %v109, %v111
      %113 = vst [vmem:[#allocation2] sm:$0x1] %v112
    $region21: #{tpu_custom_call.1} parent=1 // pred_fallthru
      _
    %p114 = scmp.le.s32.totalorder %s100, 8
    // Predicated region
    $region22: #{tpu_custom_call.1} parent=1 // pred_check
      %p115 = pneg %p114
    $region23: #{tpu_custom_call.1} parent=1 // pred_check_branch
      %117 = sbr.rel (%p115) target = $region25
    $region24: #{tpu_custom_call.1} parent=1 // pred_region
      %v118 = vld [vmem:[#allocation2] sm:$0x1]
      %v119 = vadd.f32 %v118, %v97
      %120 = vst [vmem:[#allocation2] sm:$0x1] %v119
    $region25: #{tpu_custom_call.1} parent=1 // pred_fallthru
      _
    // Predicated region
    $region26: #{tpu_custom_call.1} parent=1 // pred_check
      %p121 = pneg %p46
    $region27: #{tpu_custom_call.1} parent=1 // pred_check_branch
      %123 = sbr.rel (%p121) target = $region29
    $region28: #{tpu_custom_call.1} parent=1 // pred_region
      %v124 = vld [vmem:[#allocation2] sm:$0x1]
      %vm125 = vcmask 1040384
      %v126 = vsel %vm125, %v124, 0.0
      %127 = vadd.xlane.f32.xlu0 %v126
      %v128 = vpop.xlane.xlu0 %127
      %vm129 = vcmask 0
      %130 = vst.msk [vmem:[#allocation3] sm:$0x1] %vm129, %v128
    $region29: #{tpu_custom_call.1} parent=1 // pred_fallthru
      _
    // Predicated region
    $region30: #{tpu_custom_call.1} parent=1 // pred_check
      _
    $region31: #{tpu_custom_call.1} parent=1 // pred_check_branch
      %132 = sbr.rel (0) target = $region33
    $region32: #{tpu_custom_call.1} parent=1 // pred_region
      %s134 = ssub.s32 16, 16
      %135 = vsyncadd [#allocation4], %s134
      %s137 = sshll.u32 [#allocation3], 4
      %s138 = int_to_ptr.vmem [resolvable:$true] %s137
      %140 = dma.vmem_to_hbm [thread:$0]  %s138, 16, %s3, [#allocation4]
    $region33: #{tpu_custom_call.1} parent=1 // pred_fallthru
      _
    // Predicated region
    $region34: #{tpu_custom_call.1} parent=1 // pred_check
      _
    $region35: #{tpu_custom_call.1} parent=1 // pred_check_branch
      %142 = sbr.rel (0) target = $region37
    $region36: #{tpu_custom_call.1} parent=1 // pred_region
      %143 = dma.done [#allocation4], 16
    $region37: #{tpu_custom_call.1} parent=1 // pred_fallthru
      _
    %144 = vsyncpa [#allocation4], 1

</llo_original>
